<compile_context>
chip_gen: v7x
topology: tpu7x:2x2x1
jax: 0.10.0
libtpu: 0.0.40
codegen_flags: <defaults>
</compile_context>

<pallas_src>
import functools

import jax
import jax.numpy as jnp
from jax import lax
from jax.experimental import pallas as pl
from jax.experimental.pallas import tpu as pltpu


def _npairs_kernel(r1_ref, r2_ref, out_ref, m_sc, l_sc, diag_sc, *,
                   tile, b_real, b_pad, resident):
    i = pl.program_id(0)          # row tile                     (parallel)
    k = pl.program_id(1)          # column / LSE reduction tile  (arbitrary, last)

    @pl.when(k == 0)
    def _init():
        m_sc[...] = jnp.full(m_sc.shape, -jnp.inf, dtype=jnp.float32)
        l_sc[...] = jnp.zeros(l_sc.shape, dtype=jnp.float32)
        diag_sc[...] = jnp.zeros(diag_sc.shape, dtype=jnp.float32)

    r1 = r1_ref[...]                                  # (t, D) native dtype
    if resident:
        # r2 is fully resident in VMEM: slice the k-th column tile out of it.
        start = pl.multiple_of(k * tile, tile)
        r2 = r2_ref[pl.ds(start, tile), :]            # (t, D)
    else:
        r2 = r2_ref[...]                              # (t, D)

    # (t, t) score tile on the MXU: contract last dims directly (no transpose),
    # accumulate in f32.
    s = lax.dot_general(
        r1, r2,
        dimension_numbers=(((1,), (1,)), ((), ())),
        preferred_element_type=jnp.float32)

    # Mask padded columns (only present when B was padded up to the tile).
    if b_pad != b_real:
        col = lax.broadcasted_iota(jnp.int32, s.shape, 1) + k * tile
        s = jnp.where(col < b_real, s, -jnp.inf)

    # ---- online logsumexp across column tiles ----------------------------
    m_prev = m_sc[...]                                   # (t, 1)
    m_new = jnp.maximum(m_prev, jnp.max(s, axis=1, keepdims=True))
    l_sc[...] = (l_sc[...] * jnp.exp(m_prev - m_new)
                 + jnp.sum(jnp.exp(s - m_new), axis=1, keepdims=True))
    m_sc[...] = m_new

    # ---- diagonal term ----------------------------------------------------
    # NOTE: relies on row and column tiling being identical (one single `t`,
    # same origin), so the k == i column tile holds exactly the matching rows.
    @pl.when(k == i)
    def _diag():
        prod = r1.astype(jnp.float32) * r2.astype(jnp.float32)
        diag_sc[...] = jnp.sum(prod, axis=1, keepdims=True)

    # ---- finalize: per-row contribution lse_r - diag_r --------------------
    @pl.when(k == pl.num_programs(1) - 1)
    def _finalize():
        out_ref[...] = m_sc[...] + jnp.log(l_sc[...]) - diag_sc[...]


def _round_up(x, m):
    return ((x + m - 1) // m) * m


def _vmem_budget_bytes():
    """Generation-aware VMEM budget (also used as vmem_limit_bytes)."""
    try:
        cap = int(pltpu.get_tpu_info().vmem_capacity_bytes)
    except Exception:
        cap = 64 * 1024 * 1024            # conservative (v7x-sized) fallback
    # ~80% of physical VMEM, never above the practical ceiling on 128 MiB parts.
    return min(int(cap * 0.8), 110 * 1024 * 1024)


def _choose_config(B, D, in_bytes):
    """Pick (tile, padded_B, r2_resident, vmem_limit_bytes)."""
    vmem_limit = _vmem_budget_bytes()
    usable = vmem_limit - 4 * 1024 * 1024            # headroom for misc temps
    align = 16 if in_bytes < 4 else 8                # bf16 needs sublane mult of 16
    min_t = 128

    # Tiny problems: a single full-batch tile (block == full array dims).
    if B <= min_t:
        t = _round_up(B, align)
        return t, t, False, vmem_limit

    # MXU-friendly candidates, largest first; 1024 only on big-VMEM parts (v5e/v6e).
    cap_t = 1024 if usable >= 90 * 1024 * 1024 else 512
    cap_t = min(cap_t, _round_up(B, 128))
    want_two = _round_up(B, 128) >= 2 * min_t        # keep >=2 row tiles (v7x 2 TCs)
    cands = list(range(cap_t, min_t - 1, -128))

    def vmem_fits(t, resident):
        b_pad = _round_up(B, t)
        r1_bytes = 2 * t * D * in_bytes                          # double-buffered
        r2_bytes = 2 * (b_pad if resident else t) * D * in_bytes
        temps = 3 * t * t * 4 + 8 * t * 4                        # s/exp temps + scratch/out
        return r1_bytes + r2_bytes + temps <= usable

    # Prefer resident r2 (cuts its HBM traffic by a factor of B/t), then the
    # largest tile that fits.
    for resident in (True, False):
        for t in cands:
            b_pad = _round_up(B, t)
            if want_two and b_pad // t < 2:
                continue
            if vmem_fits(t, resident):
                return t, b_pad, resident, vmem_limit

    # Fallback: smallest MXU-friendly tile, streamed r2.
    # TODO(synk): for extremely large D, block the contraction dim as a third
    # grid axis (keeps t >= 256 under v7x's 64 MiB VMEM) instead of this fallback.
    t = min_t
    return t, _round_up(B, t), False, vmem_limit


def npairs_loss(r1, r2, tile=None):
    """N-Pairs loss. r1, r2: (batch, rep), f32 or bf16. Returns scalar f32."""
    assert r1.ndim == 2 and r1.shape == r2.shape
    if r2.dtype != r1.dtype:
        r2 = r2.astype(r1.dtype)
    B, D = r1.shape
    in_bytes = jnp.dtype(r1.dtype).itemsize

    if tile is None:
        t, B_pad, resident, vmem_limit = _choose_config(B, D, in_bytes)
    else:
        align = 16 if in_bytes < 4 else 8
        t = _round_up(tile, align)
        B_pad = _round_up(B, t)
        resident = False
        vmem_limit = _vmem_budget_bytes()
    n = B_pad // t

    if B_pad != B:
        pad = ((0, B_pad - B), (0, 0))
        r1 = jnp.pad(r1, pad)
        r2 = jnp.pad(r2, pad)

    if resident:
        # Constant index map -> fetched from HBM exactly once, reused for all (i, k).
        r2_spec = pl.BlockSpec((B_pad, D), lambda i, k: (0, 0))
    else:
        r2_spec = pl.BlockSpec((t, D), lambda i, k: (k, 0))

    kernel = functools.partial(
        _npairs_kernel, tile=t, b_real=B, b_pad=B_pad, resident=resident)

    cost = pl.CostEstimate(
        flops=2 * B_pad * B_pad * D,
        transcendentals=B_pad * B_pad + B_pad,
        bytes_accessed=(B_pad * D * in_bytes                              # r1 once
                        + (1 if resident else n) * B_pad * D * in_bytes   # r2
                        + B_pad * 4))                                     # per-row out

    per_row = pl.pallas_call(
        kernel,
        out_shape=jax.ShapeDtypeStruct((B_pad, 1), jnp.float32),
        grid_spec=pltpu.PrefetchScalarGridSpec(
            num_scalar_prefetch=0,
            grid=(n, n),                                      # LSE reduction axis last
            in_specs=[
                pl.BlockSpec((t, D), lambda i, k: (i, 0)),    # r1 row tile
                r2_spec,                                      # r2 column tile / resident
            ],
            out_specs=pl.BlockSpec((t, 1), lambda i, k: (i, 0)),
            scratch_shapes=[
                pltpu.VMEM((t, 1), jnp.float32),   # running max      m
                pltpu.VMEM((t, 1), jnp.float32),   # running sum-exp  l
                pltpu.VMEM((t, 1), jnp.float32),   # diagonal         diag
            ],
        ),
        compiler_params=pltpu.CompilerParams(
            dimension_semantics=("parallel", "arbitrary"),
            vmem_limit_bytes=vmem_limit,
        ),
        cost_estimate=cost,
    )(r1, r2)

    # Tiny epilogue: mean over the real rows of (lse_r - diag_r).
    return jnp.mean(per_row[:B, 0])


def _npairs_ref(r1, r2):
    scores = r1 @ r2.T
    diagonal_mean = jnp.mean(jnp.diag(scores))
    mean_lse = jnp.mean(jax.scipy.special.logsumexp(scores, axis=1))
    return -diagonal_mean + mean_lse


if __name__ == "__main__":
    key = jax.random.PRNGKey(0)
    k1, k2, k3, k4, k5, k6 = jax.random.split(key, 6)

    # 1) Small shape consistent with the module (single-tile path).
    B, D = 8, 32
    r1 = jax.random.normal(k1, (B, D), dtype=jnp.float32)
    r2 = jax.random.normal(k2, (B, D), dtype=jnp.float32)
    loss = jax.block_until_ready(npairs_loss(r1, r2))
    ref = jax.block_until_ready(_npairs_ref(r1, r2))
    assert bool(jnp.isfinite(loss)), loss
    assert jnp.allclose(loss, ref, atol=5e-2, rtol=5e-2), (loss, ref)

    # 2) Auto-config path: multi-tile grid with VMEM-resident r2 (B=256 -> n=2).
    B2, D2 = 256, 64
    a2 = jax.random.normal(k3, (B2, D2), dtype=jnp.float32)
    b2 = jax.random.normal(k4, (B2, D2), dtype=jnp.float32)
    loss2 = jax.block_until_ready(npairs_loss(a2, b2))
    ref2 = jax.block_until_ready(_npairs_ref(a2, b2))
    assert bool(jnp.isfinite(loss2)), loss2
    assert jnp.allclose(loss2, ref2, atol=5e-2, rtol=5e-2), (loss2, ref2)

    # 3) Forced small tile with a non-divisible batch: exercises padding,
    #    -inf column masking, streamed r2 and the online-LSE multi-step path.
    B3, D3 = 40, 128
    a3 = jax.random.normal(k5, (B3, D3), dtype=jnp.float32)
    b3 = jax.random.normal(k6, (B3, D3), dtype=jnp.float32)
    loss3 = jax.block_until_ready(npairs_loss(a3, b3, tile=16))
    ref3 = jax.block_until_ready(_npairs_ref(a3, b3))
    assert bool(jnp.isfinite(loss3)), loss3
    assert jnp.allclose(loss3, ref3, atol=5e-2, rtol=5e-2), (loss3, ref3)

    print("KERNEL_OK")
</pallas_src>

<mosaic_0001>
module attributes {stable_mosaic.version = 11 : i64} {
  func.func @_npairs_kernel(%arg0: i32, %arg1: i32, %arg2: memref<8x32xf32, #tpu.memory_space<vmem>>, %arg3: memref<8x32xf32, #tpu.memory_space<vmem>>, %arg4: memref<8x1xf32, #tpu.memory_space<vmem>>, %arg5: memref<8x1xf32, #tpu.memory_space<vmem>>, %arg6: memref<8x1xf32, #tpu.memory_space<vmem>>, %arg7: memref<8x1xf32, #tpu.memory_space<vmem>>) attributes {dimension_semantics = [#tpu.dimension_semantics<parallel>, #tpu.dimension_semantics<arbitrary>], iteration_bounds = array<i64: 1, 1>, scalar_prefetch = 0 : i64, scratch_operands = 3 : i64, tpu.core_type = #tpu.core_type<tc>, window_params = [{transform_indices = @transform_0, window_bounds = array<i64: 8, 32>}, {transform_indices = @transform_1, window_bounds = array<i64: 8, 32>}, {transform_indices = @transform_2, window_bounds = array<i64: 8, 1>}]} {
    %c0_i32 = arith.constant 0 : i32
    %0 = arith.cmpi eq, %arg1, %c0_i32 : i32
    %1 = arith.extui %0 : i1 to i32
    %c0_i32_0 = arith.constant 0 : i32
    %2 = arith.cmpi ne, %1, %c0_i32_0 : i32
    scf.if %2 {
      %cst_17 = arith.constant 0xFF800000 : f32
      %28 = vector.broadcast %cst_17 : f32 to vector<8x1xf32>
      %c0_18 = arith.constant 0 : index
      %c0_19 = arith.constant 0 : index
      %29 = vector.load %arg5[%c0_18, %c0_19] : memref<8x1xf32, #tpu.memory_space<vmem>>, vector<8x1xf32>
      tpu.vector_store %arg5[%c0_18, %c0_19], %28 {strides = array<i32>} : memref<8x1xf32, #tpu.memory_space<vmem>>, vector<8x1xf32>,
      %cst_20 = arith.constant 0.000000e+00 : f32
      %30 = vector.broadcast %cst_20 : f32 to vector<8x1xf32>
      %c0_21 = arith.constant 0 : index
      %c0_22 = arith.constant 0 : index
      %31 = vector.load %arg6[%c0_21, %c0_22] : memref<8x1xf32, #tpu.memory_space<vmem>>, vector<8x1xf32>
      tpu.vector_store %arg6[%c0_21, %c0_22], %30 {strides = array<i32>} : memref<8x1xf32, #tpu.memory_space<vmem>>, vector<8x1xf32>,
      %cst_23 = arith.constant 0.000000e+00 : f32
      %32 = vector.broadcast %cst_23 : f32 to vector<8x1xf32>
      %c0_24 = arith.constant 0 : index
      %c0_25 = arith.constant 0 : index
      %33 = vector.load %arg7[%c0_24, %c0_25] : memref<8x1xf32, #tpu.memory_space<vmem>>, vector<8x1xf32>
      tpu.vector_store %arg7[%c0_24, %c0_25], %32 {strides = array<i32>} : memref<8x1xf32, #tpu.memory_space<vmem>>, vector<8x1xf32>,
    } else {
    }
    %c0 = arith.constant 0 : index
    %c0_1 = arith.constant 0 : index
    %3 = vector.load %arg2[%c0, %c0_1] : memref<8x32xf32, #tpu.memory_space<vmem>>, vector<8x32xf32>
    %c0_2 = arith.constant 0 : index
    %c0_3 = arith.constant 0 : index
    %4 = vector.load %arg3[%c0_2, %c0_3] : memref<8x32xf32, #tpu.memory_space<vmem>>, vector<8x32xf32>
    %cst = arith.constant dense<0.000000e+00> : vector<8x8xf32>
    %5 = tpu.matmul %3, %4, %cst {dimension_numbers = #tpu.dot_dimension_numbers<[1], [1], [0], [0], [0, 0, 1, 0], [], []>} : vector<8x32xf32>, vector<8x32xf32>, vector<8x8xf32> -> vector<8x8xf32>
    %c0_4 = arith.constant 0 : index
    %c0_5 = arith.constant 0 : index
    %6 = vector.load %arg5[%c0_4, %c0_5] : memref<8x1xf32, #tpu.memory_space<vmem>>, vector<8x1xf32>
    %cst_6 = arith.constant dense<0xFF800000> : vector<8xf32>
    %7 = vector.multi_reduction <maximumf>, %5, %cst_6 [1] : vector<8x8xf32> to vector<8xf32>
    %8 = vector.shape_cast %7 : vector<8xf32> to vector<8x1xf32>
    %9 = arith.maximumf %6, %8 : vector<8x1xf32>
    %c0_7 = arith.constant 0 : index
    %c0_8 = arith.constant 0 : index
    %10 = vector.load %arg6[%c0_7, %c0_8] : memref<8x1xf32, #tpu.memory_space<vmem>>, vector<8x1xf32>
    %11 = arith.subf %6, %9 : vector<8x1xf32>
    %12 = math.exp %11 : vector<8x1xf32>
    %13 = arith.mulf %10, %12 : vector<8x1xf32>
    %14 = vector.broadcast %9 : vector<8x1xf32> to vector<8x8xf32>
    %15 = arith.subf %5, %14 : vector<8x8xf32>
    %16 = math.exp %15 : vector<8x8xf32>
    %cst_9 = arith.constant dense<0.000000e+00> : vector<8xf32>
    %17 = vector.multi_reduction <add>, %16, %cst_9 [1] : vector<8x8xf32> to vector<8xf32>
    %18 = vector.shape_cast %17 : vector<8xf32> to vector<8x1xf32>
    %19 = arith.addf %13, %18 : vector<8x1xf32>
    %c0_10 = arith.constant 0 : index
    %c0_11 = arith.constant 0 : index
    %20 = vector.load %arg6[%c0_10, %c0_11] : memref<8x1xf32, #tpu.memory_space<vmem>>, vector<8x1xf32>
    tpu.vector_store %arg6[%c0_10, %c0_11], %19 {strides = array<i32>} : memref<8x1xf32, #tpu.memory_space<vmem>>, vector<8x1xf32>,
    %c0_12 = arith.constant 0 : index
    %c0_13 = arith.constant 0 : index
    %21 = vector.load %arg5[%c0_12, %c0_13] : memref<8x1xf32, #tpu.memory_space<vmem>>, vector<8x1xf32>
    tpu.vector_store %arg5[%c0_12, %c0_13], %9 {strides = array<i32>} : memref<8x1xf32, #tpu.memory_space<vmem>>, vector<8x1xf32>,
    %22 = arith.cmpi eq, %arg1, %arg0 : i32
    %23 = arith.extui %22 : i1 to i32
    %c0_i32_14 = arith.constant 0 : i32
    %24 = arith.cmpi ne, %23, %c0_i32_14 : i32
    scf.if %24 {
      %28 = arith.mulf %3, %4 : vector<8x32xf32>
      %cst_17 = arith.constant dense<0.000000e+00> : vector<8xf32>
      %29 = vector.multi_reduction <add>, %28, %cst_17 [1] : vector<8x32xf32> to vector<8xf32>
      %30 = vector.shape_cast %29 : vector<8xf32> to vector<8x1xf32>
      %c0_18 = arith.constant 0 : index
      %c0_19 = arith.constant 0 : index
      %31 = vector.load %arg7[%c0_18, %c0_19] : memref<8x1xf32, #tpu.memory_space<vmem>>, vector<8x1xf32>
      tpu.vector_store %arg7[%c0_18, %c0_19], %30 {strides = array<i32>} : memref<8x1xf32, #tpu.memory_space<vmem>>, vector<8x1xf32>,
    } else {
    }
    %c0_i32_15 = arith.constant 0 : i32
    %25 = arith.cmpi eq, %arg1, %c0_i32_15 : i32
    %26 = arith.extui %25 : i1 to i32
    %c0_i32_16 = arith.constant 0 : i32
    %27 = arith.cmpi ne, %26, %c0_i32_16 : i32
    scf.if %27 {
      %c0_17 = arith.constant 0 : index
      %c0_18 = arith.constant 0 : index
      %28 = vector.load %arg5[%c0_17, %c0_18] : memref<8x1xf32, #tpu.memory_space<vmem>>, vector<8x1xf32>
      %c0_19 = arith.constant 0 : index
      %c0_20 = arith.constant 0 : index
      %29 = vector.load %arg6[%c0_19, %c0_20] : memref<8x1xf32, #tpu.memory_space<vmem>>, vector<8x1xf32>
      %30 = math.log %29 : vector<8x1xf32>
      %31 = arith.addf %28, %30 : vector<8x1xf32>
      %c0_21 = arith.constant 0 : index
      %c0_22 = arith.constant 0 : index
      %32 = vector.load %arg7[%c0_21, %c0_22] : memref<8x1xf32, #tpu.memory_space<vmem>>, vector<8x1xf32>
      %33 = arith.subf %31, %32 : vector<8x1xf32>
      %c0_23 = arith.constant 0 : index
      %c0_24 = arith.constant 0 : index
      %34 = vector.load %arg4[%c0_23, %c0_24] : memref<8x1xf32, #tpu.memory_space<vmem>>, vector<8x1xf32>
      tpu.vector_store %arg4[%c0_23, %c0_24], %33 {strides = array<i32>} : memref<8x1xf32, #tpu.memory_space<vmem>>, vector<8x1xf32>,
    } else {
    }
    return
  }
  func.func @transform_0(%arg0: i32, %arg1: i32) -> (i32, i32) {
    %c0_i32 = arith.constant 0 : i32
    %c0_i32_0 = arith.constant 0 : i32
    return %arg0, %c0_i32 : i32, i32
  }
  func.func @transform_1(%arg0: i32, %arg1: i32) -> (i32, i32) {
    %c0_i32 = arith.constant 0 : i32
    %c0_i32_0 = arith.constant 0 : i32
    return %arg1, %c0_i32 : i32, i32
  }
  func.func @transform_2(%arg0: i32, %arg1: i32) -> (i32, i32) {
    %c0_i32 = arith.constant 0 : i32
    %c0_i32_0 = arith.constant 0 : i32
    return %arg0, %c0_i32 : i32, i32
  }
}

</mosaic_0001>

<llo_original>
// kernel: tpu_custom_call.1
$region0: #{tpu_custom_call.1}
  #allocation0 [shape = 'u32[]', space=smem, size = 0x4, offset = 0x4, fixed_abs, tag = 'smem constant byte address 0x4 - core index']
  #allocation1 [shape = 'u32[144,128]{1,0:T(1,128)}', space=vmem, size = 0x12000, scoped, tag = 'internal scratch']
  #allocation2 [shape = 'f32[8,1]{1,0:T(8,128)}', space=vmem, size = 0x1000, scoped, tag = 'scratch operand']
  #allocation3 [shape = 'f32[8,1]{1,0:T(8,128)}', space=vmem, size = 0x1000, scoped, tag = 'scratch operand']
  #allocation4 [shape = 'f32[8,1]{1,0:T(8,128)}', space=vmem, size = 0x1000, scoped, tag = 'scratch operand']
  %s0 = inlined_call_operand.hbm [shape: f32[8,32], index: 0, kind: input, shape index: {}]
  %s1 = inlined_call_operand.hbm [shape: f32[8,32], index: 1, kind: input, shape index: {}]
  %s2 = inlined_call_operand.vmem [shape: f32[8,1], index: 2, kind: output, shape index: {}]
  %s3 = sld [smem:[#allocation0]]
  $region38: #{tpu_custom_call.1} parent=0
    _
  %s5 = ssub.s32 1, %s3
  %s6 = scalar_select 0, %s5, %s3
  $region1: #{tpu_custom_call.1} parent=0
    #allocation5 [shape = 'u8[4096]{0}', space=vmem, size = 0x1000, scoped, tag = 'input window, operand 0, single buffered']
    #allocation6 [shape = 's32[1]{0}', space=sflag, size = 0x4, scoped, tag = 'scoped memory for tpu_custom_call.1']
    #allocation7 [shape = 'u8[4096]{0}', space=vmem, size = 0x1000, scoped, tag = 'input window, operand 1, single buffered']
    #allocation8 [shape = 's32[1]{0}', space=sflag, size = 0x4, scoped, tag = 'scoped memory for tpu_custom_call.1']
    %7 = vsyncpa [#allocation6], 0
    %8 = vsyncpa [#allocation8], 0
    // Predicated region
    $region2: #{tpu_custom_call.1} parent=1 // pred_check
      _
    $region3: #{tpu_custom_call.1} parent=1 // pred_check_branch
      %10 = sbr.rel (0) target = $region5
    $region4: #{tpu_custom_call.1} parent=1 // pred_region
      %s12 = ssub.s32 128, 128
      %13 = vsyncadd [#allocation6], %s12
      %s15 = sshll.u32 [#allocation5], 4
      %s16 = int_to_ptr.vmem [resolvable:$true] %s15
      %18 = dma.hbm_to_vmem [thread:$0]  %s0, 128, %s16, [#allocation6]
    $region5: #{tpu_custom_call.1} parent=1 // pred_fallthru
      _
    // Predicated region
    $region6: #{tpu_custom_call.1} parent=1 // pred_check
      _
    $region7: #{tpu_custom_call.1} parent=1 // pred_check_branch
      %20 = sbr.rel (0) target = $region9
    $region8: #{tpu_custom_call.1} parent=1 // pred_region
      %s22 = ssub.s32 128, 128
      %23 = vsyncadd [#allocation8], %s22
      %s25 = sshll.u32 [#allocation7], 4
      %s26 = int_to_ptr.vmem [resolvable:$true] %s25
      %28 = dma.hbm_to_vmem [thread:$0]  %s1, 128, %s26, [#allocation8]
    $region9: #{tpu_custom_call.1} parent=1 // pred_fallthru
      _
    // Predicated region
    $region10: #{tpu_custom_call.1} parent=1 // pred_check
      _
    $region11: #{tpu_custom_call.1} parent=1 // pred_check_branch
      %30 = sbr.rel (0) target = $region13
    $region12: #{tpu_custom_call.1} parent=1 // pred_region
      %31 = dma.done [#allocation6], 128
    $region13: #{tpu_custom_call.1} parent=1 // pred_fallthru
      _
    // Predicated region
    $region14: #{tpu_custom_call.1} parent=1 // pred_check
      _
    $region15: #{tpu_custom_call.1} parent=1 // pred_check_branch
      %33 = sbr.rel (0) target = $region17
    $region16: #{tpu_custom_call.1} parent=1 // pred_region
      %34 = dma.done [#allocation8], 128
    $region17: #{tpu_custom_call.1} parent=1 // pred_fallthru
      _
    %p35 = scmp.eq.s32.totalorder 0, 0
    // Predicated region
    $region18: #{tpu_custom_call.1} parent=1 // pred_check
      %p36 = pneg %p35
    $region19: #{tpu_custom_call.1} parent=1 // pred_check_branch
      %38 = sbr.rel (%p36) target = $region21
    $region20: #{tpu_custom_call.1} parent=1 // pred_region
      %vm39 = vcmask 7168
      %40 = vst.msk [vmem:[#allocation2] sm:$0xff] %vm39, -inf
      %41 = vst.msk [vmem:[#allocation3] sm:$0xff] %vm39, 0.0
      %42 = vst.msk [vmem:[#allocation4] sm:$0xff] %vm39, 0.0
    $region21: #{tpu_custom_call.1} parent=1 // pred_fallthru
      _
    %v43 = vld [vmem:[#allocation5] sm:$0xff]
    %v44 = vld [vmem:[#allocation7] sm:$0xff]
    %vm45 = vcmask 261120
    %v47 = vsel %vm45, %v43, 0
    %v50 = vsel %vm45, %v44, 0
    %52 = vmatprep.subr.mxu0 0.0
    %53 = vmatpush1.xpose.msra.mxu0 %v50
    %54 = vmatprep.subr.mxu0 0.0
    %55 = vmatpush1.xpose.msra.mxu0 0.0
    %56 = vmatprep.subr.mxu0 0.0
    %57 = vmatpush1.xpose.msra.mxu0 0.0
    %58 = vmatprep.subr.mxu0 0.0
    %59 = vmatpush1.xpose.msra.mxu0 0.0
    %60 = vmatprep.subr.mxu0 0.0
    %61 = vmatpush1.xpose.msra.mxu0 0.0
    %62 = vmatprep.subr.mxu0 0.0
    %63 = vmatpush1.xpose.msra.mxu0 0.0
    %64 = vmatprep.subr.mxu0 0.0
    %65 = vmatpush1.xpose.msra.mxu0 0.0
    %66 = vmatprep.subr.mxu0 0.0
    %67 = vmatpush1.xpose.msra.mxu0 0.0
    %68 = vmatprep.subr.mxu0 0.0
    %69 = vmatpush1.xpose.msra.mxu0 0.0
    %70 = vmatprep.subr.mxu0 0.0
    %71 = vmatpush1.xpose.msra.mxu0 0.0
    %72 = vmatprep.subr.mxu0 0.0
    %73 = vmatpush1.xpose.msra.mxu0 0.0
    %74 = vmatprep.subr.mxu0 0.0
    %75 = vmatpush1.xpose.msra.mxu0 0.0
    %76 = vmatprep.subr.mxu0 0.0
    %77 = vmatpush1.xpose.msra.mxu0 0.0
    %78 = vmatprep.subr.mxu0 0.0
    %79 = vmatpush1.xpose.msra.mxu0 0.0
    %80 = vmatprep.subr.mxu0 0.0
    %81 = vmatpush1.xpose.msra.mxu0 0.0
    %82 = vmatprep.subr.mxu0 0.0
    %83 = vmatpush1.xpose.msra.mxu0 0.0
    %84 = vmatprep.subr.mxu0 0.0
    %85 = vmatpush1.xpose.msra.mxu0 0.0
    %86 = vmatprep.subr.mxu0 0.0
    %87 = vmatpush1.xpose.msra.mxu0 0.0
    %88 = vmatprep.subr.mxu0 0.0
    %89 = vmatpush1.xpose.msra.mxu0 0.0
    %90 = vmatprep.subr.mxu0 0.0
    %91 = vmatpush1.xpose.msra.mxu0 0.0
    %92 = vmatprep.subr.mxu0 0.0
    %93 = vmatpush1.xpose.msra.mxu0 0.0
    %94 = vmatprep.subr.mxu0 0.0
    %95 = vmatpush1.xpose.msra.mxu0 0.0
    %96 = vmatprep.subr.mxu0 0.0
    %97 = vmatpush1.xpose.msra.mxu0 0.0
    %98 = vmatprep.subr.mxu0 0.0
    %99 = vmatpush1.xpose.msra.mxu0 0.0
    %100 = vmatprep.subr.mxu0 0.0
    %101 = vmatpush1.xpose.msra.mxu0 0.0
    %102 = vmatprep.subr.mxu0 0.0
    %103 = vmatpush1.xpose.msra.mxu0 0.0
    %104 = vmatprep.subr.mxu0 0.0
    %105 = vmatpush1.xpose.msra.mxu0 0.0
    %106 = vmatprep.subr.mxu0 0.0
    %107 = vmatpush1.xpose.msra.mxu0 0.0
    %108 = vmatprep.subr.mxu0 0.0
    %109 = vmatpush1.xpose.msra.mxu0 0.0
    %110 = vmatprep.subr.mxu0 0.0
    %111 = vmatpush1.xpose.msra.mxu0 0.0
    %112 = vmatprep.subr.mxu0 0.0
    %113 = vmatpush1.xpose.msra.mxu0 0.0
    %114 = vmatprep.subr.mxu0 0.0
    %115 = vmatpush1.xpose.msra.mxu0 0.0
    %116 = vmatprep.mubr.f32.mxu0 0.0
    %117 = vmatmul.mubr.f32.gmra.mrb[0].mxu0 %v47
    %v118 = vpop.f32.mrb[0].mxu0
    %v119 = vadd.f32 0.0, %v118
    %v120 = vpop.f32.mrb[0].mxu0
    %121 = vdwg.mxu0
    %v122 = vld [vmem:[#allocation2] sm:$0xff]
    %vm123 = vcmask 64512
    %v124 = vsel %vm123, %v119, -inf
    %125 = vmax.xlane.f32.xlu0 %v124
    %v126 = vpop.xlane.xlu0 %125
    %v127 = vmax.f32 %v122, %v126
    %v128 = vld [vmem:[#allocation3] sm:$0xff]
    %v129 = vsub.f32 %v122, %v127
    %v130 = vmul.f32 %v129, 1.442695
    %v131 = vpow.pop %v130
    %v132 = vmul.f32 %v128, %v131
    %134 = vset.pattern.permute.xlu0 0
    %135 = vperm.xlu0 %134, %v127
    %v136 = vpop.permute.xlu0 %135
    %v138 = vsub.f32 %v119, %v136
    %v139 = vmul.f32 %v138, 1.442695
    %v140 = vpow.pop %v139
    %v141 = vsel %vm123, %v140, 0.0
    %142 = vadd.xlane.f32.xlu0 %v141
    %v143 = vpop.xlane.xlu0 %142
    %v144 = vadd.f32 %v132, %v143
    %vm145 = vcmask 7168
    %146 = vst.msk [vmem:[#allocation3] sm:$0xff] %vm145, %v144
    %147 = vst.msk [vmem:[#allocation2] sm:$0xff] %vm145, %v127
    %p148 = scmp.eq.s32.totalorder 0, 0
    // Predicated region
    $region22: #{tpu_custom_call.1} parent=1 // pred_check
      %p149 = pneg %p148
    $region23: #{tpu_custom_call.1} parent=1 // pred_check_branch
      %151 = sbr.rel (%p149) target = $region25
    $region24: #{tpu_custom_call.1} parent=1 // pred_region
      %v152 = vmul.f32 %v43, %v44
      %v153 = vsel %vm45, %v152, 0.0
      %154 = vadd.xlane.f32.xlu0 %v153
      %v155 = vpop.xlane.xlu0 %154
      %156 = vst.msk [vmem:[#allocation4] sm:$0xff] %vm145, %v155
    $region25: #{tpu_custom_call.1} parent=1 // pred_fallthru
      _
    // Predicated region
    $region26: #{tpu_custom_call.1} parent=1 // pred_check
      %p157 = pneg %p35
    $region27: #{tpu_custom_call.1} parent=1 // pred_check_branch
      %159 = sbr.rel (%p157) target = $region29
    $region28: #{tpu_custom_call.1} parent=1 // pred_region
      %v160 = vld [vmem:[#allocation2] sm:$0xff]
      %v161 = vld [vmem:[#allocation3] sm:$0xff]
      %v162 = vlog2.pop %v161
      %v163 = vmul.f32 %v162, 0.6931472
      %v164 = vadd.f32 %v160, %v163
      %v165 = vld [vmem:[#allocation4] sm:$0xff]
      %v166 = vsub.f32 %v164, %v165
      %167 = vst.msk [vmem:[%s2] sm:$0xff] %vm145, %v166
    $region29: #{tpu_custom_call.1} parent=1 // pred_fallthru
      _
    // Predicated region
    $region30: #{tpu_custom_call.1} parent=1 // pred_check
      _
    $region31: #{tpu_custom_call.1} parent=1 // pred_check_branch
      %169 = sbr.rel (0) target = $region33
    $region32: #{tpu_custom_call.1} parent=1 // pred_region
      _
    $region33: #{tpu_custom_call.1} parent=1 // pred_fallthru
      _
    // Predicated region
    $region34: #{tpu_custom_call.1} parent=1 // pred_check
      _
    $region35: #{tpu_custom_call.1} parent=1 // pred_check_branch
      %171 = sbr.rel (0) target = $region37
    $region36: #{tpu_custom_call.1} parent=1 // pred_region
      _
    $region37: #{tpu_custom_call.1} parent=1 // pred_fallthru
      _
    %172 = vsyncpa [#allocation6], 1
    %173 = vsyncpa [#allocation8], 1

</llo_original>
